<compile_context>
chip_gen: v7x
topology: tpu7x:2x2x1
jax: 0.10.0
libtpu: 0.0.40
codegen_flags: <defaults>
</compile_context>

<pallas_src>
import math

import jax
import jax.numpy as jnp
from jax.experimental import pallas as pl
from jax.experimental.pallas import tpu as pltpu


def _groupwise_ce_partial_kernel(x_ref, out_ref, acc_ref):
    s = pl.program_id(1)

    @pl.when(s == 0)
    def _init():
        acc_ref[...] = jnp.zeros_like(acc_ref)

    x = x_ref[...].astype(jnp.float32)            # (G, block_n), cast inside VMEM
    d = x - x[0:1, :]                             # x_j - x_0, sublane broadcast
    # Stable softplus: max(d,0) + log(1 + exp(-|d|)); 1 exp + 1 log per element.
    ce = jnp.maximum(d, 0.0) + jnp.log(1.0 + jnp.exp(-jnp.abs(d)))
    acc_ref[...] += jnp.sum(ce, keepdims=True)    # per-tile partial sum (f32)

    @pl.when(s == pl.num_programs(1) - 1)
    def _finalize():
        out_ref[0] = acc_ref[...]                 # raw partial; normalized outside


def groupwise_ce_loss(logits, labels=None, examples_per_group: int = 1,
                      block_n: int = 1024, num_partials: int = 2):
    """Pallas implementation of GroupwiseCELoss.forward (reduction='mean')."""
    del labels  # unused, matching the reference forward
    g = int(examples_per_group)
    if g < 2:
        raise ValueError("examples_per_group must be >= 2 for GroupwiseCELoss")

    x = jnp.asarray(logits).reshape(-1, g)        # (N, G), native dtype (no pre-cast)
    n = x.shape[0]
    x_t = x.T                                     # (G, N): N on the 128-lane axis

    tiles = pl.cdiv(n, block_n)
    steps = pl.cdiv(tiles, num_partials)
    n_pad = num_partials * steps * block_n
    pad = n_pad - n
    if pad:
        # Zero padding: each padded column contributes exactly g * ln2 (removed below).
        x_t = jnp.pad(x_t, ((0, 0), (0, pad)))

    partials = pl.pallas_call(
        _groupwise_ce_partial_kernel,
        out_shape=jax.ShapeDtypeStruct((num_partials, 1, 1), jnp.float32),
        grid_spec=pltpu.PrefetchScalarGridSpec(
            num_scalar_prefetch=0,
            grid=(num_partials, steps),
            in_specs=[pl.BlockSpec((g, block_n),
                                   lambda p, s: (0, p * steps + s))],
            out_specs=pl.BlockSpec((1, 1, 1), lambda p, s: (p, 0, 0)),
            scratch_shapes=[pltpu.VMEM((1, 1), jnp.float32)],
        ),
        compiler_params=pltpu.CompilerParams(
            dimension_semantics=("parallel", "arbitrary")),
        cost_estimate=pl.CostEstimate(
            flops=5 * n_pad * g,
            transcendentals=2 * n_pad * g,
            bytes_accessed=n_pad * g * x_t.dtype.itemsize + num_partials * 4),
    )(x_t)

    # Row 0 of every real group contributes exactly ln2 (d == 0), and every
    # zero-padded column contributes g * ln2; remove both analytically.
    correction = math.log(2.0) * (pad * g + n)
    total = jnp.sum(partials) - jnp.float32(correction)
    return total / jnp.float32(n * (g - 1))


def _reference(logits, examples_per_group):
    """Pure-JAX reference mirroring the PyTorch loop, for verification."""
    x = logits.reshape(-1, examples_per_group).astype(jnp.float32)
    g = x.shape[1]
    loss = 0.0
    for idx in range(g - 1):
        pair = x[:, jnp.array([0, idx + 1])]                      # (N, 2)
        lse = jax.scipy.special.logsumexp(pair, axis=-1)          # (N,)
        loss = loss + jnp.mean(lse - pair[:, 0])
    return loss / (g - 1)


if __name__ == "__main__":
    key = jax.random.PRNGKey(0)
    k1, k2 = jax.random.split(key)

    examples_per_group = 8      # G
    num_groups = 300            # N (not a multiple of 128 -> exercises padding path)
    # Flat logits, as produced by a reranker head: shape (N*G,)
    logits = jax.random.normal(k1, (num_groups * examples_per_group,), dtype=jnp.float32)
    labels = jax.random.randint(k2, (num_groups * examples_per_group,), 0, 2)  # unused

    loss = groupwise_ce_loss(logits, labels,
                             examples_per_group=examples_per_group,
                             block_n=128)   # small tile so the demo grid is (2, 2)
    loss = jax.block_until_ready(loss)

    ref = _reference(logits, examples_per_group)
    assert jnp.allclose(loss, ref, rtol=1e-5, atol=1e-5), (loss, ref)

    print("KERNEL_OK")
</pallas_src>

<mosaic_0001>
module attributes {stable_mosaic.version = 11 : i64} {
  func.func @_groupwise_ce_partial_kernel(%arg0: i32, %arg1: i32, %arg2: memref<8x128xf32, #tpu.memory_space<vmem>>, %arg3: memref<1x1x1xf32, #tpu.memory_space<vmem>>, %arg4: memref<1x1xf32, #tpu.memory_space<vmem>>) attributes {dimension_semantics = [#tpu.dimension_semantics<parallel>, #tpu.dimension_semantics<arbitrary>], iteration_bounds = array<i64: 2, 2>, scalar_prefetch = 0 : i64, scratch_operands = 1 : i64, tpu.core_type = #tpu.core_type<tc>, window_params = [{transform_indices = @transform_0, window_bounds = array<i64: 8, 128>}, {transform_indices = @transform_1, window_bounds = array<i64: 1, 1, 1>}]} {
    %c0_i32 = arith.constant 0 : i32
    %0 = arith.cmpi eq, %arg1, %c0_i32 : i32
    %1 = arith.extui %0 : i1 to i32
    %c0_i32_0 = arith.constant 0 : i32
    %2 = arith.cmpi ne, %1, %c0_i32_0 : i32
    scf.if %2 {
      %cst_10 = arith.constant 0.000000e+00 : f32
      %28 = vector.broadcast %cst_10 : f32 to vector<1x1xf32>
      %c0_11 = arith.constant 0 : index
      %c0_12 = arith.constant 0 : index
      %29 = vector.load %arg4[%c0_11, %c0_12] : memref<1x1xf32, #tpu.memory_space<vmem>>, vector<1x1xf32>
      tpu.vector_store %arg4[%c0_11, %c0_12], %28 {strides = array<i32>} : memref<1x1xf32, #tpu.memory_space<vmem>>, vector<1x1xf32>,
    } else {
    }
    %c0 = arith.constant 0 : index
    %c0_1 = arith.constant 0 : index
    %3 = vector.load %arg2[%c0, %c0_1] : memref<8x128xf32, #tpu.memory_space<vmem>>, vector<8x128xf32>
    %4 = vector.extract_strided_slice %3 {offsets = [0, 0], sizes = [1, 128], strides = [1, 1]} : vector<8x128xf32> to vector<1x128xf32>
    %5 = vector.broadcast %4 : vector<1x128xf32> to vector<8x128xf32>
    %6 = arith.subf %3, %5 : vector<8x128xf32>
    %cst = arith.constant 0.000000e+00 : f32
    %7 = vector.broadcast %cst : f32 to vector<8x128xf32>
    %8 = arith.maximumf %6, %7 : vector<8x128xf32>
    %9 = math.absf %6 : vector<8x128xf32>
    %cst_2 = arith.constant 0.000000e+00 : f32
    %10 = vector.broadcast %cst_2 : f32 to vector<8x128xf32>
    %11 = arith.subf %10, %9 : vector<8x128xf32>
    %12 = math.exp %11 : vector<8x128xf32>
    %cst_3 = arith.constant 1.000000e+00 : f32
    %13 = vector.broadcast %cst_3 : f32 to vector<8x128xf32>
    %14 = arith.addf %13, %12 : vector<8x128xf32>
    %15 = math.log %14 : vector<8x128xf32>
    %16 = arith.addf %8, %15 : vector<8x128xf32>
    %c0_4 = arith.constant 0 : index
    %c0_5 = arith.constant 0 : index
    %17 = vector.load %arg4[%c0_4, %c0_5] : memref<1x1xf32, #tpu.memory_space<vmem>>, vector<1x1xf32>
    %18 = vector.shape_cast %16 : vector<8x128xf32> to vector<1x8x128xf32>
    %cst_6 = arith.constant dense<0.000000e+00> : vector<1xf32>
    %19 = vector.multi_reduction <add>, %18, %cst_6 [1, 2] : vector<1x8x128xf32> to vector<1xf32>
    %20 = vector.shape_cast %19 : vector<1xf32> to vector<1x1x1xf32>
    %21 = vector.extract %20[0, 0, 0] : f32 from vector<1x1x1xf32>
    %22 = vector.broadcast %21 : f32 to vector<1x1xf32>
    %23 = arith.addf %17, %22 : vector<1x1xf32>
    %c0_7 = arith.constant 0 : index
    %c0_8 = arith.constant 0 : index
    %24 = vector.load %arg4[%c0_7, %c0_8] : memref<1x1xf32, #tpu.memory_space<vmem>>, vector<1x1xf32>
    tpu.vector_store %arg4[%c0_7, %c0_8], %23 {strides = array<i32>} : memref<1x1xf32, #tpu.memory_space<vmem>>, vector<1x1xf32>,
    %c1_i32 = arith.constant 1 : i32
    %25 = arith.cmpi eq, %arg1, %c1_i32 : i32
    %26 = arith.extui %25 : i1 to i32
    %c0_i32_9 = arith.constant 0 : i32
    %27 = arith.cmpi ne, %26, %c0_i32_9 : i32
    scf.if %27 {
      %c0_10 = arith.constant 0 : index
      %c0_11 = arith.constant 0 : index
      %28 = vector.load %arg4[%c0_10, %c0_11] : memref<1x1xf32, #tpu.memory_space<vmem>>, vector<1x1xf32>
      %c0_12 = arith.constant 0 : index
      %c0_13 = arith.constant 0 : index
      %c0_14 = arith.constant 0 : index
      %29 = vector.load %arg3[%c0_12, %c0_13, %c0_14] : memref<1x1x1xf32, #tpu.memory_space<vmem>>, vector<1x1x1xf32>
      %30 = vector.shape_cast %29 : vector<1x1x1xf32> to vector<1x1xf32>
      %31 = vector.shape_cast %28 : vector<1x1xf32> to vector<1x1x1xf32>
      tpu.vector_store %arg3[%c0_12, %c0_13, %c0_14], %31 {strides = array<i32>} : memref<1x1x1xf32, #tpu.memory_space<vmem>>, vector<1x1x1xf32>,
    } else {
    }
    return
  }
  func.func @transform_0(%arg0: i32, %arg1: i32) -> (i32, i32) {
    %c2_i32 = arith.constant 2 : i32
    %0 = arith.muli %arg0, %c2_i32 : i32
    %1 = arith.addi %0, %arg1 : i32
    %c0_i32 = arith.constant 0 : i32
    %c0_i32_0 = arith.constant 0 : i32
    return %c0_i32, %1 : i32, i32
  }
  func.func @transform_1(%arg0: i32, %arg1: i32) -> (i32, i32, i32) {
    %c0_i32 = arith.constant 0 : i32
    %c0_i32_0 = arith.constant 0 : i32
    %c0_i32_1 = arith.constant 0 : i32
    return %arg0, %c0_i32, %c0_i32_0 : i32, i32, i32
  }
}

</mosaic_0001>

<llo_original>
// kernel: tpu_custom_call.1
$region0: #{tpu_custom_call.1}
  #allocation0 [shape = 'u32[]', space=smem, size = 0x4, offset = 0x4, fixed_abs, tag = 'smem constant byte address 0x4 - core index']
  #allocation1 [shape = 'u32[144,128]{1,0:T(1,128)}', space=vmem, size = 0x12000, scoped, tag = 'internal scratch']
  #allocation2 [shape = 'f32[1,1]{1,0:T(1,128)}', space=vmem, size = 0x200, scoped, tag = 'scratch operand']
  %s0 = inlined_call_operand.hbm [shape: f32[8,512], index: 0, kind: input, shape index: {}]
  %s1 = inlined_call_operand.vmem [shape: f32[2,1,1], index: 1, kind: output, shape index: {}]
  %s2 = sld [smem:[#allocation0]]
  $region49: #{tpu_custom_call.1} parent=0
    _
  %s4 = ssub.s32 1, %s2
  %s5 = scalar_select 0, %s4, %s2
  $region1: #{tpu_custom_call.1} parent=0
    #allocation3 [shape = 'u8[8192]{0}', space=vmem, size = 0x2000, scoped, tag = 'input window, operand 0']
    #allocation4 [shape = 's32[2]{0}', space=sflag, size = 0x8, scoped, tag = 'scoped memory for tpu_custom_call.1']
    %6 = vsyncpa [#allocation4], 0
    %s7 = scalar_lea.sflag [#allocation4], 1
    %8 = vsyncpa %s7, 0
    loop: start=0, step=1, limit=6
    $region2: #{tpu_custom_call.1} parent=1 // loop_pre_header
      _
    $region3: #{tpu_custom_call.1} parent=1 // loop_header
      %s10 = sphi 0, %s14
      %p11 = scmp.ge.s32.totalorder %s10, 6
      %s17 = sphi 0, %s29
      %s18 = sphi 0, %s25
      %s19 = sphi 0, %s17
      %s20 = sphi 0, %s18
      %s21 = sphi 0, %s19
      %s22 = sphi 0, %s20
      %s36 = sphi 0, %s38
      %s39 = sphi 0, %s36
      %s40 = sphi 0, %s39
      %s56 = sphi 0, %s40
      %s62 = sphi 0, %s64
      %s65 = sphi 0, %s62
      %s66 = sphi 0, %s65
      %s82 = sphi 0, %s66
    $region4: #{tpu_custom_call.1} parent=1 // loop_header_branch
      %13 = sbr.rel (%p11) target = $region8
    $region5: #{tpu_custom_call.1} parent=1 // loop_body
      %s15 = ssub.s32 %s10, 1
      %s16 = ssub.s32 %s10, 2
      %s23 = sadd.s32 1, %s18
      %p24 = scmp.ge.s32.totalorder %s23, 2
      %s25 = scalar_select %p24, 0, %s23
      %s26 = sadd.s32 1, %s17
      %s27 = scalar_select %p24, %s26, %s17
      %p28 = scmp.ge.s32.totalorder %s27, 2
      %s29 = scalar_select %p28, 0, %s27
      %s30 = smul.u32 %s17, 2
      %s31 = sadd.s32 %s30, %s18
      %s32 = smul.u32 %s29, 2
      %s33 = sadd.s32 %s32, %s25
      %s34 = ssub.s32 %s31, %s33
      %p35 = scmp.eq.s32.totalorder %s34, 0
      %s37 = sadd.s32 %s36, 1
      %s38 = scalar_select %p35, %s36, %s37
      %p41 = pneg %p35
      %p42 = scmp.eq.s32.totalorder %s10, 3
      %p43 = por %p41, %p42
      %p44 = scmp.ne.s32.totalorder %s36, %s39
      %p45 = scmp.eq.s32.totalorder %s10, 0
      %p46 = por %p44, %p45
      %p47 = scmp.ne.s32.totalorder %s36, %s39
      %p48 = scmp.eq.s32.totalorder %s15, 3
      %p49 = por %p47, %p48
      %p50 = scmp.ne.s32.totalorder %s39, %s40
      %p51 = scmp.eq.s32.totalorder %s15, 0
      %p52 = por %p50, %p51
      %p53 = scmp.ne.s32.totalorder %s39, %s40
      %p54 = scmp.eq.s32.totalorder %s16, 3
      %p55 = por %p53, %p54
      %p57 = scmp.ne.s32.totalorder %s40, %s56
      %p58 = scmp.eq.s32.totalorder %s16, 0
      %p59 = por %p57, %p58
      %s60 = ssub.s32 %s17, %s29
      %p61 = scmp.eq.s32.totalorder %s60, 0
      %s63 = sadd.s32 %s62, 1
      %s64 = scalar_select %p61, %s62, %s63
      %p67 = pneg %p61
      %p68 = scmp.eq.s32.totalorder %s10, 3
      %p69 = por %p67, %p68
      %p70 = scmp.ne.s32.totalorder %s62, %s65
      %p71 = scmp.eq.s32.totalorder %s10, 0
      %p72 = por %p70, %p71
      %p73 = scmp.ne.s32.totalorder %s62, %s65
      %p74 = scmp.eq.s32.totalorder %s15, 3
      %p75 = por %p73, %p74
      %p76 = scmp.ne.s32.totalorder %s65, %s66
      %p77 = scmp.eq.s32.totalorder %s15, 0
      %p78 = por %p76, %p77
      %p79 = scmp.ne.s32.totalorder %s65, %s66
      %p80 = scmp.eq.s32.totalorder %s16, 3
      %p81 = por %p79, %p80
      %p83 = scmp.ne.s32.totalorder %s66, %s82
      %p84 = scmp.eq.s32.totalorder %s16, 0
      %p85 = por %p83, %p84
      %p86 = scmp.le.s32.totalorder 1, %s10
      %p87 = scmp.lt.s32.totalorder %s10, 5
      %p88 = pnand %p86, %p87
      %p89 = pneg %p88
      // Predicated region
      $region9: #{tpu_custom_call.1} parent=5 // pred_check
        _
      $region10: #{tpu_custom_call.1} parent=5 // pred_check_branch
        %91 = sbr.rel (%p88) target = $region12
      $region11: #{tpu_custom_call.1} parent=5 // pred_region
        %s92 = ssub.s32 %s10, 1
      $region12: #{tpu_custom_call.1} parent=5 // pred_fallthru
        _
      %p93 = scmp.lt.s32.totalorder %s10, 4
      // Predicated region
      $region13: #{tpu_custom_call.1} parent=5 // pred_check
        %p94 = pneg %p93
      $region14: #{tpu_custom_call.1} parent=5 // pred_check_branch
        %96 = sbr.rel (%p94) target = $region16
      $region15: #{tpu_custom_call.1} parent=5 // pred_region
        // Predicated region
        $region17: #{tpu_custom_call.1} parent=15 // pred_check
          %p97 = pneg %p46
        $region18: #{tpu_custom_call.1} parent=15 // pred_check_branch
          %99 = sbr.rel (%p97) target = $region20
        $region19: #{tpu_custom_call.1} parent=15 // pred_region
          %s100 = sand.u32 %s36, 1
          %s101 = scalar_lea.sflag [#allocation4], %s100
          %s102 = sand.u32 %s36, 1
          %s103 = smul.addr %s102, 8
          %s104 = scalar_lea.vmem [#allocation3], %s103
          %s105 = smul.u32 %s17, 2
          %s106 = sadd.s32 %s105, %s18
          %s108 = ssub.s32 128, 128
          %109 = vsyncadd %s101, %s108
          %s110 = smul.addr %s106, 128
          %s111 = scalar_lea.hbm %s0, %s110
          %s113 = sshll.u32 %s104, 4
          %s114 = int_to_ptr.vmem [resolvable:$true] %s113
          %116 = dma.hbm_to_vmem [thread:$0]  %s111, 128, %s114, %s101
        $region20: #{tpu_custom_call.1} parent=15 // pred_fallthru
          _
      $region16: #{tpu_custom_call.1} parent=5 // pred_fallthru
        _
      %p117 = scmp.le.s32.totalorder 1, %s10
      %p118 = scmp.lt.s32.totalorder %s10, 5
      %p119 = pnand %p117, %p118
      %p120 = pneg %p119
      // Predicated region
      $region21: #{tpu_custom_call.1} parent=5 // pred_check
        _
      $region22: #{tpu_custom_call.1} parent=5 // pred_check_branch
        %122 = sbr.rel (%p119) target = $region24
      $region23: #{tpu_custom_call.1} parent=5 // pred_region
        %s123 = ssub.s32 %s10, 1
        %s124 = sand.u32 %s39, 1
        %s125 = scalar_lea.sflag [#allocation4], %s124
        %s126 = sand.u32 %s39, 1
        %s127 = smul.addr %s126, 8
        %s128 = scalar_lea.vmem [#allocation3], %s127
        // Predicated region
        $region25: #{tpu_custom_call.1} parent=23 // pred_check
          %p129 = pneg %p52
        $region26: #{tpu_custom_call.1} parent=23 // pred_check_branch
          %131 = sbr.rel (%p129) target = $region28
        $region27: #{tpu_custom_call.1} parent=23 // pred_region
          %132 = dma.done %s125, 128
        $region28: #{tpu_custom_call.1} parent=23 // pred_fallthru
          _
        %s133 = sand.u32 %s39, 1
        %s134 = scalar_lea.sflag [#allocation4], %s133
        %s135 = sand.u32 %s39, 1
        %s136 = smul.addr %s135, 8
        %s137 = scalar_lea.vmem [#allocation3], %s136
        %p138 = pneg %p52
        %p139 = pneg %p49
        %p140 = pneg %p78
        %p141 = pneg %p75
        %p142 = scmp.lt.s32.totalorder %s19, 1
        %s143 = scalar_select %p142, %s19, 1
        %s144 = scalar_lea.vmem %s1, %s143
        %s145 = smul.u32 %s19, 2
        %s146 = sadd.s32 %s145, %s20
        %p147 = scmp.lt.s32.totalorder %s19, 1
        %s148 = scalar_select %p147, %s19, 1
        %s149 = scalar_lea.vmem %s1, %s148
        %p150 = scmp.eq.s32.totalorder %s20, 0
        // Predicated region
        $region29: #{tpu_custom_call.1} parent=23 // pred_check
          %p151 = pneg %p150
        $region30: #{tpu_custom_call.1} parent=23 // pred_check_branch
          %153 = sbr.rel (%p151) target = $region32
        $region31: #{tpu_custom_call.1} parent=23 // pred_region
          %vm154 = vcmask 0
          %155 = vst.msk [vmem:[#allocation2] sm:$0x1] %vm154, 0.0
        $region32: #{tpu_custom_call.1} parent=23 // pred_fallthru
          _
        %v156 = vld [vmem:[%s128] sm:$0xff]
        %v157 = vlaneseq
        %v158 = vshrl.u32 %v157, 7
        %v159 = vsub.s32 0, %v158
        %v160 = vrot.slane %v156, %v159
        %v161 = vsub.f32 %v156, %v160
        %v162 = vmax.f32 %v161, 0.0
        %v163 = vand.u32 2147483647, %v161
        %v164 = vsub.f32 0.0, %v163
        %v165 = vmul.f32 %v164, 1.442695
        %v166 = vpow.pop %v165
        %v167 = vadd.f32 %v166, 1.0
        %v168 = vlog2.pop %v167
        %v169 = vmul.f32 %v168, 0.6931472
        %v170 = vadd.f32 %v162, %v169
        %v171 = vld [vmem:[#allocation2] sm:$0x1]
        %172 = vadd.xlane.f32.xlu0 %v170
        %v173 = vpop.xlane.xlu0 %172
        %v174 = vrot.slane %v173, 4
        %v175 = vadd.f32 %v173, %v174
        %v176 = vrot.slane %v175, 2
        %v177 = vadd.f32 %v175, %v176
        %v178 = vrot.slane %v177, 1
        %v179 = vadd.f32 %v177, %v178
        %s180 = vtos %v179
        %v181 = vstv %s180
        %v182 = vadd.f32 %v171, %v181
        %vm183 = vcmask 0
        %184 = vst.msk [vmem:[#allocation2] sm:$0x1] %vm183, %v182
        %p185 = scmp.eq.s32.totalorder %s20, 1
        // Predicated region
        $region33: #{tpu_custom_call.1} parent=23 // pred_check
          %p186 = pneg %p185
        $region34: #{tpu_custom_call.1} parent=23 // pred_check_branch
          %188 = sbr.rel (%p186) target = $region36
        $region35: #{tpu_custom_call.1} parent=23 // pred_region
          %v189 = vld [vmem:[#allocation2] sm:$0x1]
          %190 = vst.msk [vmem:[%s149] sm:$0x1] %vm183, %v189
        $region36: #{tpu_custom_call.1} parent=23 // pred_fallthru
          _
        %p191 = scmp.lt.s32.totalorder %s19, 1
        %s192 = scalar_select %p191, %s19, 1
        %s193 = scalar_lea.vmem %s1, %s192
        // Predicated region
        $region37: #{tpu_custom_call.1} parent=23 // pred_check
          %p194 = pneg %p75
        $region38: #{tpu_custom_call.1} parent=23 // pred_check_branch
          %196 = sbr.rel (%p194) target = $region40
        $region39: #{tpu_custom_call.1} parent=23 // pred_region
          _
        $region40: #{tpu_custom_call.1} parent=23 // pred_fallthru
          _
      $region24: #{tpu_custom_call.1} parent=5 // pred_fallthru
        _
      %p197 = scmp.le.s32.totalorder 2, %s10
      // Predicated region
      $region41: #{tpu_custom_call.1} parent=5 // pred_check
        %p198 = pneg %p197
      $region42: #{tpu_custom_call.1} parent=5 // pred_check_branch
        %200 = sbr.rel (%p198) target = $region44
      $region43: #{tpu_custom_call.1} parent=5 // pred_region
        %s201 = ssub.s32 %s10, 2
        // Predicated region
        $region45: #{tpu_custom_call.1} parent=43 // pred_check
          %p202 = pneg %p81
        $region46: #{tpu_custom_call.1} parent=43 // pred_check_branch
          %204 = sbr.rel (%p202) target = $region48
        $region47: #{tpu_custom_call.1} parent=43 // pred_region
          %p205 = scmp.lt.s32.totalorder %s21, 1
          %s206 = scalar_select %p205, %s21, 1
          %s207 = scalar_lea.vmem %s1, %s206
        $region48: #{tpu_custom_call.1} parent=43 // pred_fallthru
          _
      $region44: #{tpu_custom_call.1} parent=5 // pred_fallthru
        _
    $region6: #{tpu_custom_call.1} parent=1 // loop_footer
      %s14 = sadd.s32 1, %s10
    $region7: #{tpu_custom_call.1} parent=1 // loop_footer_branch
      %9 = sbr.rel target = $region3
    $region8: #{tpu_custom_call.1} parent=1 // loop_exit
      _
    %208 = vsyncpa [#allocation4], 1
    %s209 = scalar_lea.sflag [#allocation4], 1
    %210 = vsyncpa %s209, 1

</llo_original>
